<compile_context>
chip_gen: v5e
topology: v5e:2x2
jax: 0.10.0
libtpu: 0.0.40
codegen_flags: <defaults>
</compile_context>

<pallas_src>
import functools

import jax
import jax.numpy as jnp
from jax.experimental import pallas as pl
from jax.experimental.pallas import tpu as pltpu


# ---------------------------------------------------------------------------
# Kernels: one MXU matmul per row tile + bias (+ residual) + ReLU epilogue.
# ---------------------------------------------------------------------------
def _propagator_kernel(x_ref, w_ref, b_ref, o_ref):
    y = jnp.dot(x_ref[...], w_ref[...], preferred_element_type=jnp.float32)
    y = y + b_ref[...]
    o_ref[...] = jnp.maximum(y, 0.0).astype(o_ref.dtype)


def _propagator_residual_kernel(x_ref, w_ref, b_ref, res_ref, o_ref):
    y = jnp.dot(x_ref[...], w_ref[...], preferred_element_type=jnp.float32)
    y = y + b_ref[...] + res_ref[...].astype(jnp.float32)
    o_ref[...] = jnp.maximum(y, 0.0).astype(o_ref.dtype)


# ---------------------------------------------------------------------------
# Parameter preparation (call ONCE per weight set; hoisted out of the hot path)
# ---------------------------------------------------------------------------
def choose_pack(output_size: int, target_lanes: int = 128) -> int:
    """Particles packed per row so the output last dim is a 128-lane multiple."""
    if output_size < target_lanes and target_lanes % output_size == 0:
        return target_lanes // output_size
    return 1


def prepare_propagator_params(w, b, *, target_lanes: int = 128, param_dtype=None):
    """Build the packed (block-diagonal) weight and tiled bias once.

    Args:
      w: [D_out, D_in] nn.Linear weight (PyTorch layout).
      b: [D_out] bias.
      param_dtype: optional dtype (e.g. jnp.bfloat16) for the packed weight;
        accumulation in the kernel stays f32, bias stays f32.
    Returns:
      (w_big [pack*D_in, pack*D_out], b_big [1, pack*D_out])
    """
    d_out, d_in = w.shape
    pack = choose_pack(d_out, target_lanes)
    w_t = w.T
    if param_dtype is not None:
        w_t = w_t.astype(param_dtype)
    if pack > 1:
        w_big = jnp.kron(jnp.eye(pack, dtype=w_t.dtype), w_t)        # [p*D_in, p*D_out]
        b_big = jnp.tile(b.astype(jnp.float32), pack).reshape(1, pack * d_out)
    else:
        w_big = w_t
        b_big = b.astype(jnp.float32).reshape(1, d_out)
    return w_big, b_big


# ---------------------------------------------------------------------------
# Tiling helpers (bytes-per-step driven).
# ---------------------------------------------------------------------------
_SINGLE_STEP_MAX_BYTES = 2 << 20    # whole problem below this -> one grid step
_TARGET_STEP_BYTES = 3 << 20        # ~3 MiB of HBM traffic per grid step
_VMEM_TILE_BUDGET = 20 << 20        # conservative budget (fits v7x 32 MiB scoped)


def _round_up(v, m):
    return ((v + m - 1) // m) * m


def _choose_block_rows(n_rows, bytes_per_row, max_block, row_align):
    """Row-tile size.  Single step for small problems; otherwise ~3 MiB/step
    with a minimum of 2 steps (DMA/compute overlap, v7x megacore), clamped to
    max_block (VMEM budget / user cap) and aligned to the sublane packing."""
    if n_rows * bytes_per_row <= _SINGLE_STEP_MAX_BYTES:
        return n_rows
    blk = max(row_align, (_TARGET_STEP_BYTES // bytes_per_row) // row_align * row_align)
    two_step = _round_up(pl.cdiv(n_rows, 2), row_align)
    cap = max(row_align, (max_block // row_align) * row_align)
    blk = min(blk, two_step, cap)
    if blk >= n_rows:
        return n_rows
    return blk


# ---------------------------------------------------------------------------
# Forward wrapper.
# ---------------------------------------------------------------------------
@functools.partial(jax.jit,
                   static_argnames=("block_rows", "out_dtype", "buffer_count"))
def propagator_forward(x, w_big, b_big, res=None, *,
                       block_rows=2048, out_dtype=jnp.float32, buffer_count=2):
    """Pallas implementation of Propagator.forward.

    Args:
      x:     [N, D_in]  (f32 or bf16; consumed as-is, no wrapper cast)
      w_big: [pack*D_in, pack*D_out] packed weight from prepare_propagator_params
      b_big: [1, pack*D_out] f32 packed bias from prepare_propagator_params
      res:   optional [N, D_out] residual
      block_rows: user cap on packed-row tile size
      out_dtype:  output dtype (f32 default; bf16 halves store traffic)
      buffer_count: >2 enables deeper pipelining on x/res/out tiles
    Returns:
      [N, D_out] out_dtype  = relu(x @ W^T + b [+ res])
    """
    n, d_in = x.shape
    k, m = w_big.shape
    pack = k // d_in
    assert pack * d_in == k, "w_big first dim must be pack * D_in"
    d_out = m // pack

    # ---- pad N up to a multiple of pack (keeps the lane-dense output slab) ----
    n_pad = _round_up(n, pack)
    if n_pad != n:
        x = jnp.pad(x, ((0, n_pad - n), (0, 0)))
        if res is not None:
            res = jnp.pad(res, ((0, n_pad - n), (0, 0)))

    x_p = x.reshape(n_pad // pack, pack * d_in)
    res_p = None if res is None else res.reshape(n_pad // pack, pack * d_out)
    n_rows = n_pad // pack

    # ---- bytes-driven tile sizing ----
    x_isz = jnp.dtype(x_p.dtype).itemsize
    o_isz = jnp.dtype(out_dtype).itemsize
    itemsizes = [x_isz, o_isz]
    r_isz = 0
    if res_p is not None:
        r_isz = jnp.dtype(res_p.dtype).itemsize
        itemsizes.append(r_isz)
    # Sub-32-bit dtypes pack rows along sublanes: align to 16 (bf16) / 32 (8-bit).
    row_align = max(8, 32 // min(itemsizes))

    bytes_per_row = k * x_isz + m * o_isz + (m * r_isz if res_p is not None else 0)
    w_isz = jnp.dtype(w_big.dtype).itemsize
    weight_vmem = 2 * (w_big.size * w_isz + b_big.size * 4)
    per_row_vmem = max(2, buffer_count) * bytes_per_row
    max_blk_vmem = max(row_align,
                       int((_VMEM_TILE_BUDGET - weight_vmem) // max(per_row_vmem, 1))
                       // row_align * row_align)
    blk = _choose_block_rows(n_rows, bytes_per_row,
                             min(block_rows, max_blk_vmem), row_align)
    grid = (pl.cdiv(n_rows, blk),)

    # ---- specs ----
    def _tiled_spec(shape, index_map):
        if buffer_count > 2:
            return pl.BlockSpec(shape, index_map, pipeline_mode=pl.Buffered(buffer_count))
        return pl.BlockSpec(shape, index_map)

    x_spec = _tiled_spec((blk, k), lambda i: (i, 0))
    w_spec = pl.BlockSpec((k, m), lambda i: (0, 0))    # grid-invariant
    b_spec = pl.BlockSpec((1, m), lambda i: (0, 0))    # grid-invariant
    o_spec = _tiled_spec((blk, m), lambda i: (i, 0))
    out_shape = jax.ShapeDtypeStruct((n_rows, m), out_dtype)

    # ---- cost estimate (real block-diagonal FLOPs, real bytes) ----
    flops = 2 * n_rows * k * m                         # == 2 * N * D_in * D_out * pack
    bytes_accessed = (x_p.size * x_isz
                      + w_big.size * w_isz
                      + b_big.size * 4
                      + n_rows * m * o_isz
                      + (res_p.size * r_isz if res_p is not None else 0))
    cost = pl.CostEstimate(flops=flops, transcendentals=0,
                           bytes_accessed=bytes_accessed)

    needed_vmem = weight_vmem + max(2, buffer_count) * blk * bytes_per_row
    vmem_limit = int(min(max(2 * needed_vmem, 32 << 20), 48 << 20))
    cparams = pltpu.CompilerParams(dimension_semantics=("parallel",),
                                   vmem_limit_bytes=vmem_limit)

    if res_p is None:
        out = pl.pallas_call(
            _propagator_kernel,
            out_shape=out_shape,
            grid=grid,
            in_specs=[x_spec, w_spec, b_spec],
            out_specs=o_spec,
            compiler_params=cparams,
            cost_estimate=cost,
        )(x_p, w_big, b_big)
    else:
        res_spec = _tiled_spec((blk, m), lambda i: (i, 0))
        out = pl.pallas_call(
            _propagator_residual_kernel,
            out_shape=out_shape,
            grid=grid,
            in_specs=[x_spec, w_spec, b_spec, res_spec],
            out_specs=o_spec,
            compiler_params=cparams,
            cost_estimate=cost,
        )(x_p, w_big, b_big, res_p)

    return out.reshape(n_pad, d_out)[:n]


def propagator_reference(x, w, b, res=None):
    y = x @ w.T + b[None, :]
    if res is not None:
        y = y + res
    return jnp.maximum(y, 0.0)


if __name__ == "__main__":
    # Shapes consistent with the module's forward signature:
    #   n_particles=128, input_size=64, output_size=32
    n_particles, input_size, output_size = 128, 64, 32

    key = jax.random.PRNGKey(0)
    kx, kw, kb, kr, kx2, kr2 = jax.random.split(key, 6)

    x = jax.random.normal(kx, (n_particles, input_size), dtype=jnp.float32)
    w = jax.random.normal(kw, (output_size, input_size), dtype=jnp.float32) * 0.1
    b = jax.random.normal(kb, (output_size,), dtype=jnp.float32) * 0.1
    res = jax.random.normal(kr, (n_particles, output_size), dtype=jnp.float32)

    # Weight packing done ONCE (hoisted out of the per-call path).
    w_big, b_big = prepare_propagator_params(w, b)
    w_big_bf16, _ = prepare_propagator_params(w, b, param_dtype=jnp.bfloat16)

    ref_plain = propagator_reference(x, w, b)
    ref_res = propagator_reference(x, w, b, res)

    # residual=False path (f32)
    y0 = propagator_forward(x, w_big, b_big)
    # residual=True path (f32)
    y1 = propagator_forward(x, w_big, b_big, res)
    # bf16 inputs/weights produced upstream (no wrapper cast) + bf16 output
    y2 = propagator_forward(x.astype(jnp.bfloat16), w_big_bf16, b_big, res,
                            out_dtype=jnp.bfloat16)
    # N not a multiple of the pack factor: wrapper pads rows instead of losing
    # the lane-dense output path.
    n_odd = 130
    x_odd = jax.random.normal(kx2, (n_odd, input_size), dtype=jnp.float32)
    res_odd = jax.random.normal(kr2, (n_odd, output_size), dtype=jnp.float32)
    y3 = propagator_forward(x_odd, w_big, b_big, res_odd)
    ref_odd = propagator_reference(x_odd, w, b, res_odd)

    jax.block_until_ready((y0, y1, y2, y3))

    assert y0.shape == (n_particles, output_size)
    assert y1.shape == (n_particles, output_size)
    assert y2.shape == (n_particles, output_size) and y2.dtype == jnp.bfloat16
    assert y3.shape == (n_odd, output_size)
    assert jnp.allclose(y0, ref_plain, atol=1e-4, rtol=1e-4)
    assert jnp.allclose(y1, ref_res, atol=1e-4, rtol=1e-4)
    assert jnp.allclose(y2.astype(jnp.float32), ref_res, atol=5e-2, rtol=5e-2)
    assert jnp.allclose(y3, ref_odd, atol=1e-4, rtol=1e-4)

    print("KERNEL_OK")
</pallas_src>

<mosaic_0001>
module attributes {stable_mosaic.version = 11 : i64} {
  func.func @_propagator_kernel(%arg0: i32, %arg1: memref<32x256xf32, #tpu.memory_space<vmem>>, %arg2: memref<256x128xf32, #tpu.memory_space<vmem>>, %arg3: memref<1x128xf32, #tpu.memory_space<vmem>>, %arg4: memref<32x128xf32, #tpu.memory_space<vmem>>) attributes {dimension_semantics = [#tpu.dimension_semantics<parallel>], iteration_bounds = array<i64: 1>, scalar_prefetch = 0 : i64, scratch_operands = 0 : i64, tpu.core_type = #tpu.core_type<tc>, window_params = [{transform_indices = @transform_0, window_bounds = array<i64: 32, 256>}, {pipeline_mode = #tpu.pipeline_mode<synchronous>, transform_indices = @transform_1, window_bounds = array<i64: 256, 128>}, {pipeline_mode = #tpu.pipeline_mode<synchronous>, transform_indices = @transform_2, window_bounds = array<i64: 1, 128>}, {transform_indices = @transform_3, window_bounds = array<i64: 32, 128>}]} {
    %c0 = arith.constant 0 : index
    %c0_0 = arith.constant 0 : index
    %0 = vector.load %arg1[%c0, %c0_0] : memref<32x256xf32, #tpu.memory_space<vmem>>, vector<32x256xf32>
    %c0_1 = arith.constant 0 : index
    %c0_2 = arith.constant 0 : index
    %1 = vector.load %arg2[%c0_1, %c0_2] : memref<256x128xf32, #tpu.memory_space<vmem>>, vector<256x128xf32>
    %cst = arith.constant dense<0.000000e+00> : vector<32x128xf32>
    %2 = tpu.matmul %0, %1, %cst {dimension_numbers = #tpu.dot_dimension_numbers<[1], [0], [0], [1], [0, 0, 1, 1], [], []>} : vector<32x256xf32>, vector<256x128xf32>, vector<32x128xf32> -> vector<32x128xf32>
    %c0_3 = arith.constant 0 : index
    %c0_4 = arith.constant 0 : index
    %3 = vector.load %arg3[%c0_3, %c0_4] : memref<1x128xf32, #tpu.memory_space<vmem>>, vector<1x128xf32>
    %4 = vector.broadcast %3 : vector<1x128xf32> to vector<32x128xf32>
    %5 = arith.addf %2, %4 : vector<32x128xf32>
    %cst_5 = arith.constant 0.000000e+00 : f32
    %6 = vector.broadcast %cst_5 : f32 to vector<32x128xf32>
    %7 = arith.maximumf %5, %6 : vector<32x128xf32>
    %c0_6 = arith.constant 0 : index
    %c0_7 = arith.constant 0 : index
    %8 = vector.load %arg4[%c0_6, %c0_7] : memref<32x128xf32, #tpu.memory_space<vmem>>, vector<32x128xf32>
    tpu.vector_store %arg4[%c0_6, %c0_7], %7 {strides = array<i32>} : memref<32x128xf32, #tpu.memory_space<vmem>>, vector<32x128xf32>,
    return
  }
  func.func @transform_0(%arg0: i32) -> (i32, i32) {
    %c0_i32 = arith.constant 0 : i32
    %c0_i32_0 = arith.constant 0 : i32
    return %arg0, %c0_i32 : i32, i32
  }
  func.func @transform_1(%arg0: i32) -> (i32, i32) {
    %c0_i32 = arith.constant 0 : i32
    %c0_i32_0 = arith.constant 0 : i32
    %c0_i32_1 = arith.constant 0 : i32
    return %c0_i32, %c0_i32_0 : i32, i32
  }
  func.func @transform_2(%arg0: i32) -> (i32, i32) {
    %c0_i32 = arith.constant 0 : i32
    %c0_i32_0 = arith.constant 0 : i32
    %c0_i32_1 = arith.constant 0 : i32
    return %c0_i32, %c0_i32_0 : i32, i32
  }
  func.func @transform_3(%arg0: i32) -> (i32, i32) {
    %c0_i32 = arith.constant 0 : i32
    %c0_i32_0 = arith.constant 0 : i32
    return %arg0, %c0_i32 : i32, i32
  }
}

</mosaic_0001>

<llo_original>
// kernel: propagator_forward.1
$region0: #{propagator_forward.1}
  #allocation0 [shape = 'u32[]', space=smem, size = 0x4, offset = 0x4, fixed_abs, tag = 'smem constant byte address 0x4 - core index']
  #allocation1 [shape = 'u32[72,128]{1,0:T(1,128)}', space=vmem, size = 0x9000, scoped, tag = 'internal scratch']
  %s0 = inlined_call_operand.vmem [shape: f32[32,256], index: 0, kind: input, shape index: {}]
  %s1 = inlined_call_operand.vmem [shape: f32[256,128], index: 1, kind: input, shape index: {}]
  %s2 = inlined_call_operand.vmem [shape: f32[1,128], index: 2, kind: input, shape index: {}]
  %s3 = inlined_call_operand.vmem [shape: f32[32,128], index: 3, kind: output, shape index: {}]
  %s4 = sld [smem:[#allocation0]]
  $region22: #{propagator_forward.1} parent=0
    _
  %s6 = ssub.s32 1, %s4
  %s7 = scalar_select 0, %s6, %s4
  // Predicated region
  $region2: #{propagator_forward.1} parent=0 // pred_check
    _
  $region3: #{propagator_forward.1} parent=0 // pred_check_branch
    %9 = sbr.rel (0) target = $region5
  $region4: #{propagator_forward.1} parent=0 // pred_region
    _
  $region5: #{propagator_forward.1} parent=0 // pred_fallthru
    _
  // Predicated region
  $region6: #{propagator_forward.1} parent=0 // pred_check
    _
  $region7: #{propagator_forward.1} parent=0 // pred_check_branch
    %11 = sbr.rel (0) target = $region9
  $region8: #{propagator_forward.1} parent=0 // pred_region
    _
  $region9: #{propagator_forward.1} parent=0 // pred_fallthru
    _
  // Predicated region
  $region10: #{propagator_forward.1} parent=0 // pred_check
    _
  $region11: #{propagator_forward.1} parent=0 // pred_check_branch
    %13 = sbr.rel (0) target = $region13
  $region12: #{propagator_forward.1} parent=0 // pred_region
    _
  $region13: #{propagator_forward.1} parent=0 // pred_fallthru
    _
  %v14 = vld [vmem:[%s0] sm:$0xff]
  %v15 = vld [vmem:[%s0 + $0x8] sm:$0xff]
  %v16 = vld [vmem:[%s0 + $0x10] sm:$0xff]
  %v17 = vld [vmem:[%s0 + $0x18] sm:$0xff]
  %v18 = vld [vmem:[%s0 + $0x20] sm:$0xff]
  %v19 = vld [vmem:[%s0 + $0x28] sm:$0xff]
  %v20 = vld [vmem:[%s0 + $0x30] sm:$0xff]
  %v21 = vld [vmem:[%s0 + $0x38] sm:$0xff]
  %v22 = vld [vmem:[%s1] sm:$0xff]
  %v23 = vld [vmem:[%s1 + $0x8] sm:$0xff]
  %v24 = vld [vmem:[%s1 + $0x10] sm:$0xff]
  %v25 = vld [vmem:[%s1 + $0x18] sm:$0xff]
  %v26 = vld [vmem:[%s1 + $0x20] sm:$0xff]
  %v27 = vld [vmem:[%s1 + $0x28] sm:$0xff]
  %v28 = vld [vmem:[%s1 + $0x30] sm:$0xff]
  %v29 = vld [vmem:[%s1 + $0x38] sm:$0xff]
  %v30 = vld [vmem:[%s1 + $0x40] sm:$0xff]
  %v31 = vld [vmem:[%s1 + $0x48] sm:$0xff]
  %v32 = vld [vmem:[%s1 + $0x50] sm:$0xff]
  %v33 = vld [vmem:[%s1 + $0x58] sm:$0xff]
  %v34 = vld [vmem:[%s1 + $0x60] sm:$0xff]
  %v35 = vld [vmem:[%s1 + $0x68] sm:$0xff]
  %v36 = vld [vmem:[%s1 + $0x70] sm:$0xff]
  %v37 = vld [vmem:[%s1 + $0x78] sm:$0xff]
  %v38 = vld [vmem:[%s1 + $0x80] sm:$0xff]
  %v39 = vld [vmem:[%s1 + $0x88] sm:$0xff]
  %v40 = vld [vmem:[%s1 + $0x90] sm:$0xff]
  %v41 = vld [vmem:[%s1 + $0x98] sm:$0xff]
  %v42 = vld [vmem:[%s1 + $0xa0] sm:$0xff]
  %v43 = vld [vmem:[%s1 + $0xa8] sm:$0xff]
  %v44 = vld [vmem:[%s1 + $0xb0] sm:$0xff]
  %v45 = vld [vmem:[%s1 + $0xb8] sm:$0xff]
  %v46 = vld [vmem:[%s1 + $0xc0] sm:$0xff]
  %v47 = vld [vmem:[%s1 + $0xc8] sm:$0xff]
  %v48 = vld [vmem:[%s1 + $0xd0] sm:$0xff]
  %v49 = vld [vmem:[%s1 + $0xd8] sm:$0xff]
  %v50 = vld [vmem:[%s1 + $0xe0] sm:$0xff]
  %v51 = vld [vmem:[%s1 + $0xe8] sm:$0xff]
  %v52 = vld [vmem:[%s1 + $0xf0] sm:$0xff]
  %v53 = vld [vmem:[%s1 + $0xf8] sm:$0xff]
  %v54 = vld [vmem:[%s2] sm:$0x1]
  %v56 = vperm.slane %v54, 0
  %58 = vmatpush.msra.mxu0 %v37
  %59 = vmatpush.msra.mxu0 %v36
  %60 = vmatpush.msra.mxu0 %v35
  %61 = vmatpush.msra.mxu0 %v34
  %62 = vmatpush.msra.mxu0 %v33
  %63 = vmatpush.msra.mxu0 %v32
  %64 = vmatpush.msra.mxu0 %v31
  %65 = vmatpush.msra.mxu0 %v30
  %66 = vmatpush.msra.mxu0 %v29
  %67 = vmatpush.msra.mxu0 %v28
  %68 = vmatpush.msra.mxu0 %v27
  %69 = vmatpush.msra.mxu0 %v26
  %70 = vmatpush.msra.mxu0 %v25
  %71 = vmatpush.msra.mxu0 %v24
  %72 = vmatpush.msra.mxu0 %v23
  %73 = vmatpush.msra.mxu0 %v22
  %74 = vmatmul.f32.gmra.mxu0 %v14
  %v75 = vpop.f32.mrf.mxu0
  %v76 = vadd.f32 %v56, %v75
  %77 = vmatmul.f32.gmra.mxu0 %v16
  %v78 = vpop.f32.mrf.mxu0
  %v79 = vadd.f32 %v56, %v78
  %80 = vmatmul.f32.gmra.mxu0 %v18
  %v81 = vpop.f32.mrf.mxu0
  %v82 = vadd.f32 %v56, %v81
  %83 = vmatmul.f32.gmra.mxu0 %v20
  %v84 = vpop.f32.mrf.mxu0
  %v85 = vadd.f32 %v56, %v84
  %86 = vdwg.mxu0
  %87 = vmatpush.msra.mxu0 %v53
  %88 = vmatpush.msra.mxu0 %v52
  %89 = vmatpush.msra.mxu0 %v51
  %90 = vmatpush.msra.mxu0 %v50
  %91 = vmatpush.msra.mxu0 %v49
  %92 = vmatpush.msra.mxu0 %v48
  %93 = vmatpush.msra.mxu0 %v47
  %94 = vmatpush.msra.mxu0 %v46
  %95 = vmatpush.msra.mxu0 %v45
  %96 = vmatpush.msra.mxu0 %v44
  %97 = vmatpush.msra.mxu0 %v43
  %98 = vmatpush.msra.mxu0 %v42
  %99 = vmatpush.msra.mxu0 %v41
  %100 = vmatpush.msra.mxu0 %v40
  %101 = vmatpush.msra.mxu0 %v39
  %102 = vmatpush.msra.mxu0 %v38
  %103 = vmatmul.f32.gmra.mxu0 %v15
  %v104 = vpop.f32.mrf.mxu0
  %v105 = vadd.f32 %v76, %v104
  %106 = vmatmul.f32.gmra.mxu0 %v17
  %v107 = vpop.f32.mrf.mxu0
  %v108 = vadd.f32 %v79, %v107
  %109 = vmatmul.f32.gmra.mxu0 %v19
  %v110 = vpop.f32.mrf.mxu0
  %v111 = vadd.f32 %v82, %v110
  %112 = vmatmul.f32.gmra.mxu0 %v21
  %v113 = vpop.f32.mrf.mxu0
  %v114 = vadd.f32 %v85, %v113
  %115 = vdwg.mxu0
  %v116 = vmax.f32 %v105, 0.0
  %v117 = vmax.f32 %v108, 0.0
  %v118 = vmax.f32 %v111, 0.0
  %v119 = vmax.f32 %v114, 0.0
  %120 = vst [vmem:[%s3] sm:$0xff] %v116
  %121 = vst [vmem:[%s3 + $0x8] sm:$0xff] %v117
  %122 = vst [vmem:[%s3 + $0x10] sm:$0xff] %v118
  %123 = vst [vmem:[%s3 + $0x18] sm:$0xff] %v119
  // Predicated region
  $region14: #{propagator_forward.1} parent=0 // pred_check
    _
  $region15: #{propagator_forward.1} parent=0 // pred_check_branch
    %125 = sbr.rel (0) target = $region17
  $region16: #{propagator_forward.1} parent=0 // pred_region
    _
  $region17: #{propagator_forward.1} parent=0 // pred_fallthru
    _
  // Predicated region
  $region18: #{propagator_forward.1} parent=0 // pred_check
    _
  $region19: #{propagator_forward.1} parent=0 // pred_check_branch
    %127 = sbr.rel (0) target = $region21
  $region20: #{propagator_forward.1} parent=0 // pred_region
    _
  $region21: #{propagator_forward.1} parent=0 // pred_fallthru
    _

</llo_original>
